<compile_context>
chip_gen: v5e
topology: v5e:2x2
jax: 0.10.0
libtpu: 0.0.40
codegen_flags: <defaults>
</compile_context>

<pallas_src>
import functools

import jax
import jax.numpy as jnp
from jax import lax
from jax.experimental import pallas as pl
from jax.experimental.pallas import tpu as pltpu

_MAX_TILE_B = 4096   # lanes per grid step (upper bound)
_CHUNK_B = 512       # lanes per inner sub-chunk (live-activation working set)


def _round_up(n, m):
    return ((n + m - 1) // m) * m


def _mlp_kernel(num_hidden, num_chunks, chunk_b,
                x_ref, w_in_ref, b_in_ref, w_h_ref, b_h_ref, w_out_ref,
                b_out_ref, o_ref):
    """Fused MLP forward for one batch tile (feature-major activations).

    x_ref     : (2, TB)              -- input, transposed (batch on lanes)
    w_in_ref  : (W, 2)               -- PyTorch [out, in] layout
    b_in_ref  : (W, 1)
    w_h_ref   : (num_hidden, W, W)   -- PyTorch [out, in] layout per layer
    b_h_ref   : (num_hidden, W, 1)
    w_out_ref : (W, 1)               -- output weights as a column
    b_out_ref : (1,) in SMEM         -- scalar output bias
    o_ref     : (1, TB)              -- lane-dense output row
    TB = num_chunks * chunk_b; work is done per chunk_b-lane sub-chunk.
    """
    # Grid-/chunk-invariant operands: load once, hoisted out of the loops.
    w_in0 = w_in_ref[:, 0:1]   # (W, 1)
    w_in1 = w_in_ref[:, 1:2]   # (W, 1)
    b_in = b_in_ref[...]       # (W, 1)
    w_out = w_out_ref[...]     # (W, 1)
    b_out = b_out_ref[0]       # scalar

    def chunk_body(c, carry):
        start = pl.multiple_of(c * chunk_b, 128)
        x0 = x_ref[0:1, pl.ds(start, chunk_b)]   # (1, CB)
        x1 = x_ref[1:2, pl.ds(start, chunk_b)]   # (1, CB)

        # Input layer: K=2 contraction on the VPU (two broadcast FMAs).
        h = jnp.tanh(w_in0 * x0 + w_in1 * x1 + b_in)   # (W, CB)

        # Hidden layers: MXU matmul with the lane-dense operand as RHS.
        def hidden_layer(l, h):
            return jnp.tanh(
                jnp.dot(w_h_ref[l], h, preferred_element_type=jnp.float32)
                + b_h_ref[l]
            )

        h = lax.fori_loop(0, num_hidden, hidden_layer, h, unroll=True)

        # Output layer: N=1 -> VPU multiply + sublane reduce; stays lane-dense.
        out = jnp.sum(w_out * h, axis=0, keepdims=True) + b_out   # (1, CB)
        o_ref[:, pl.ds(start, chunk_b)] = out.astype(o_ref.dtype)
        return carry

    # Unroll the sub-chunk loop (>=2-way) so MXU work of chunk c+1 overlaps
    # the EUP tanh of chunk c.  num_chunks <= 8 in practice -> full unroll.
    unroll = True if num_chunks <= 8 else 2
    lax.fori_loop(0, num_chunks, chunk_body, 0, unroll=unroll)


@functools.partial(jax.jit, static_argnames=("tile_b",))
def net_forward(x, params, *, tile_b=None):
    """Run the fused MLP Pallas kernel.

    x      : [B, 2] float32
    params : dict with
             w_in  [W, 2]   (PyTorch layout), b_in  [W, 1]
             w_h   [D-1, W, W],               b_h   [D-1, W, 1]
             w_out [W, 1],                    b_out [1]
    returns [B, 1] float32
    Jitted so the pad/transpose/reshape/slice around the kernel fuse.
    """
    B, in_dim = x.shape
    assert in_dim == 2
    w_in, b_in = params["w_in"], params["b_in"]
    w_h, b_h = params["w_h"], params["b_h"]
    w_out, b_out = params["w_out"], params["b_out"]
    num_hidden, width, _ = w_h.shape
    assert num_hidden >= 1, "depth must be >= 2"

    # Lane-dense batch tiles: multiple of 128.  Keep >= 2 grid steps when the
    # batch allows it (v7x megacore), then go as big as possible (<= 4096) to
    # amortize per-grid-step pipeline overhead.
    if tile_b is None:
        b_128 = _round_up(B, 128)
        if b_128 <= 128:
            tile_b = 128
        else:
            tile_b = min(_MAX_TILE_B, _round_up(pl.cdiv(b_128, 2), 128))
    assert tile_b % 128 == 0

    # Inner sub-chunk size: largest multiple of 128 that divides tile_b, <= 512.
    tile_lanes = tile_b // 128
    chunk_b = 128
    for m in (4, 3, 2, 1):
        if tile_lanes % m == 0:
            chunk_b = 128 * m
            break
    num_chunks = tile_b // chunk_b

    # Pad ragged batches; extra rows are sliced off after the kernel.
    b_pad = pl.cdiv(B, tile_b) * tile_b
    if b_pad != B:
        x = jnp.pad(x, ((0, b_pad - B), (0, 0)))
    x_t = x.T  # (2, B_pad): batch on the lane axis

    kernel = functools.partial(_mlp_kernel, num_hidden, num_chunks, chunk_b)

    out = pl.pallas_call(
        kernel,
        out_shape=jax.ShapeDtypeStruct((1, b_pad), jnp.float32),
        grid_spec=pltpu.PrefetchScalarGridSpec(
            num_scalar_prefetch=0,
            grid=(b_pad // tile_b,),
            in_specs=[
                pl.BlockSpec((2, tile_b), lambda i: (0, i)),                    # x^T
                pl.BlockSpec((width, 2), lambda i: (0, 0)),                     # w_in
                pl.BlockSpec((width, 1), lambda i: (0, 0)),                     # b_in
                pl.BlockSpec((num_hidden, width, width), lambda i: (0, 0, 0)),  # w_h
                pl.BlockSpec((num_hidden, width, 1), lambda i: (0, 0, 0)),      # b_h
                pl.BlockSpec((width, 1), lambda i: (0, 0)),                     # w_out
                pl.BlockSpec(memory_space=pltpu.MemorySpace.SMEM),              # b_out
            ],
            out_specs=pl.BlockSpec((1, tile_b), lambda i: (0, i)),
        ),
        compiler_params=pltpu.CompilerParams(
            dimension_semantics=("parallel",),
        ),
    )(x_t, w_in, b_in, w_h, b_h, w_out, b_out)

    # (1, B_pad) lane-dense slab -> (B, 1); fuses into the jitted wrapper.
    return out.reshape(b_pad, 1)[:B]


def init_params(key, width, depth):
    """Deterministic init mimicking torch.nn.Linear default U[-1/sqrt(fan_in), +]."""
    in_dim = 2
    num_hidden = depth - 1
    keys = jax.random.split(key, 6)

    def uniform(k, shape, fan_in):
        bound = 1.0 / jnp.sqrt(jnp.float32(fan_in))
        return jax.random.uniform(k, shape, jnp.float32, -bound, bound)

    return {
        "w_in": uniform(keys[0], (width, in_dim), in_dim),            # torch [out, in]
        "b_in": uniform(keys[1], (width, 1), in_dim),
        "w_h": uniform(keys[2], (num_hidden, width, width), width),   # torch [out, in]
        "b_h": uniform(keys[3], (num_hidden, width, 1), width),
        "w_out": uniform(keys[4], (width, 1), width),                 # torch (1,W) transposed
        "b_out": uniform(keys[5], (1,), width),
    }


def net_forward_ref(x, params):
    """Pure-JAX reference for correctness checking."""
    h = jnp.tanh(x @ params["w_in"].T + params["b_in"][:, 0])
    for l in range(params["w_h"].shape[0]):
        h = jnp.tanh(h @ params["w_h"][l].T + params["b_h"][l, :, 0])
    return h @ params["w_out"] + params["b_out"]


if __name__ == "__main__":
    width = 32   # neurons per hidden layer
    depth = 3    # -> 2 hidden Linear(width, width) layers
    key = jax.random.PRNGKey(0)
    k_param, k_x1, k_x2 = jax.random.split(key, 3)
    params = init_params(k_param, width, depth)

    # 1) Small batch (one 128-wide tile, single chunk).
    batch = 8
    x = jax.random.normal(k_x1, (batch, 2), dtype=jnp.float32)
    out = jax.block_until_ready(net_forward(x, params))
    ref = net_forward_ref(x, params)
    assert out.shape == (batch, 1), out.shape
    assert jnp.allclose(out, ref, atol=1e-5, rtol=1e-5), (
        f"mismatch: max abs err {jnp.max(jnp.abs(out - ref))}"
    )

    # 2) Ragged batch, default tiling: exercises padding + a 2-step grid
    #    (so v7x can shard the "parallel" axis across both TensorCores).
    batch2 = 1000
    x2 = jax.random.normal(k_x2, (batch2, 2), dtype=jnp.float32)
    out2 = jax.block_until_ready(net_forward(x2, params))
    ref2 = net_forward_ref(x2, params)
    assert out2.shape == (batch2, 1), out2.shape
    assert jnp.allclose(out2, ref2, atol=1e-5, rtol=1e-5), (
        f"mismatch: max abs err {jnp.max(jnp.abs(out2 - ref2))}"
    )

    # 3) Same data, forced big tile: exercises the inner multi-chunk loop
    #    (tile_b=1024 -> two 512-lane chunks, unrolled/interleaved).
    out3 = jax.block_until_ready(net_forward(x2, params, tile_b=1024))
    assert out3.shape == (batch2, 1), out3.shape
    assert jnp.allclose(out3, ref2, atol=1e-5, rtol=1e-5), (
        f"mismatch: max abs err {jnp.max(jnp.abs(out3 - ref2))}"
    )

    print("KERNEL_OK")
</pallas_src>

<mosaic_0001>
module attributes {stable_mosaic.version = 11 : i64} {
  func.func @_mlp_kernel(%arg0: i32, %arg1: memref<2x128xf32, #tpu.memory_space<vmem>>, %arg2: memref<32x2xf32, #tpu.memory_space<vmem>>, %arg3: memref<32x1xf32, #tpu.memory_space<vmem>>, %arg4: memref<2x32x32xf32, #tpu.memory_space<vmem>>, %arg5: memref<2x32x1xf32, #tpu.memory_space<vmem>>, %arg6: memref<32x1xf32, #tpu.memory_space<vmem>>, %arg7: memref<1xf32, #tpu.memory_space<smem>>, %arg8: memref<1x128xf32, #tpu.memory_space<vmem>>) attributes {dimension_semantics = [#tpu.dimension_semantics<parallel>], iteration_bounds = array<i64: 1>, scalar_prefetch = 0 : i64, scratch_operands = 0 : i64, tpu.core_type = #tpu.core_type<tc>, window_params = [{transform_indices = @transform_0, window_bounds = array<i64: 2, 128>}, {pipeline_mode = #tpu.pipeline_mode<synchronous>, transform_indices = @transform_1, window_bounds = array<i64: 32, 2>}, {pipeline_mode = #tpu.pipeline_mode<synchronous>, transform_indices = @transform_2, window_bounds = array<i64: 32, 1>}, {pipeline_mode = #tpu.pipeline_mode<synchronous>, transform_indices = @transform_3, window_bounds = array<i64: 2, 32, 32>}, {pipeline_mode = #tpu.pipeline_mode<synchronous>, transform_indices = @transform_4, window_bounds = array<i64: 2, 32, 1>}, {pipeline_mode = #tpu.pipeline_mode<synchronous>, transform_indices = @transform_5, window_bounds = array<i64: 32, 1>}, {transform_indices = @transform_6, window_bounds = array<i64: 1>}, {transform_indices = @transform_7, window_bounds = array<i64: 1, 128>}]} {
    %c0 = arith.constant 0 : index
    %c0_0 = arith.constant 0 : index
    %0 = vector.load %arg2[%c0, %c0_0] : memref<32x2xf32, #tpu.memory_space<vmem>>, vector<32x1xf32>
    %c0_1 = arith.constant 0 : index
    %c1 = arith.constant 1 : index
    %1 = vector.load %arg2[%c0_1, %c1] : memref<32x2xf32, #tpu.memory_space<vmem>>, vector<32x1xf32>
    %c0_2 = arith.constant 0 : index
    %c0_3 = arith.constant 0 : index
    %2 = vector.load %arg3[%c0_2, %c0_3] : memref<32x1xf32, #tpu.memory_space<vmem>>, vector<32x1xf32>
    %c0_4 = arith.constant 0 : index
    %c0_5 = arith.constant 0 : index
    %3 = vector.load %arg6[%c0_4, %c0_5] : memref<32x1xf32, #tpu.memory_space<vmem>>, vector<32x1xf32>
    %c0_6 = arith.constant 0 : index
    %4 = memref.load %arg7[%c0_6] : memref<1xf32, #tpu.memory_space<smem>>
    %c0_i32 = arith.constant 0 : i32
    %c128_i32 = arith.constant 128 : i32
    %5 = arith.muli %c0_i32, %c128_i32 : i32
    %6 = tpu.assume_multiple %5, 128 : i32
    %c0_7 = arith.constant 0 : index
    %7 = arith.index_cast %6 : i32 to index
    %8 = vector.load %arg1[%c0_7, %7] : memref<2x128xf32, #tpu.memory_space<vmem>>, vector<1x128xf32>
    %c1_8 = arith.constant 1 : index
    %9 = arith.index_cast %6 : i32 to index
    %10 = vector.load %arg1[%c1_8, %9] : memref<2x128xf32, #tpu.memory_space<vmem>>, vector<1x128xf32>
    %11 = vector.broadcast %0 : vector<32x1xf32> to vector<32x128xf32>
    %12 = vector.broadcast %8 : vector<1x128xf32> to vector<32x128xf32>
    %13 = arith.mulf %11, %12 : vector<32x128xf32>
    %14 = vector.broadcast %1 : vector<32x1xf32> to vector<32x128xf32>
    %15 = vector.broadcast %10 : vector<1x128xf32> to vector<32x128xf32>
    %16 = arith.mulf %14, %15 : vector<32x128xf32>
    %17 = arith.addf %13, %16 : vector<32x128xf32>
    %18 = vector.broadcast %2 : vector<32x1xf32> to vector<32x128xf32>
    %19 = arith.addf %17, %18 : vector<32x128xf32>
    %20 = math.tanh %19 : vector<32x128xf32>
    %c0_i32_9 = arith.constant 0 : i32
    %21 = arith.index_cast %c0_i32_9 : i32 to index
    %c0_10 = arith.constant 0 : index
    %c0_11 = arith.constant 0 : index
    %22 = vector.load %arg4[%21, %c0_10, %c0_11] : memref<2x32x32xf32, #tpu.memory_space<vmem>>, vector<1x32x32xf32>
    %23 = vector.shape_cast %22 : vector<1x32x32xf32> to vector<32x32xf32>
    %cst = arith.constant dense<0.000000e+00> : vector<32x128xf32>
    %24 = tpu.matmul %23, %20, %cst {dimension_numbers = #tpu.dot_dimension_numbers<[1], [0], [0], [1], [0, 0, 1, 1], [], []>} : vector<32x32xf32>, vector<32x128xf32>, vector<32x128xf32> -> vector<32x128xf32>
    %25 = arith.index_cast %c0_i32_9 : i32 to index
    %c0_12 = arith.constant 0 : index
    %c0_13 = arith.constant 0 : index
    %26 = vector.load %arg5[%25, %c0_12, %c0_13] : memref<2x32x1xf32, #tpu.memory_space<vmem>>, vector<1x32x1xf32>
    %27 = vector.shape_cast %26 : vector<1x32x1xf32> to vector<32x1xf32>
    %28 = vector.broadcast %27 : vector<32x1xf32> to vector<32x128xf32>
    %29 = arith.addf %24, %28 : vector<32x128xf32>
    %30 = math.tanh %29 : vector<32x128xf32>
    %c1_i32 = arith.constant 1 : i32
    %31 = arith.index_cast %c1_i32 : i32 to index
    %c0_14 = arith.constant 0 : index
    %c0_15 = arith.constant 0 : index
    %32 = vector.load %arg4[%31, %c0_14, %c0_15] : memref<2x32x32xf32, #tpu.memory_space<vmem>>, vector<1x32x32xf32>
    %33 = vector.shape_cast %32 : vector<1x32x32xf32> to vector<32x32xf32>
    %cst_16 = arith.constant dense<0.000000e+00> : vector<32x128xf32>
    %34 = tpu.matmul %33, %30, %cst_16 {dimension_numbers = #tpu.dot_dimension_numbers<[1], [0], [0], [1], [0, 0, 1, 1], [], []>} : vector<32x32xf32>, vector<32x128xf32>, vector<32x128xf32> -> vector<32x128xf32>
    %35 = arith.index_cast %c1_i32 : i32 to index
    %c0_17 = arith.constant 0 : index
    %c0_18 = arith.constant 0 : index
    %36 = vector.load %arg5[%35, %c0_17, %c0_18] : memref<2x32x1xf32, #tpu.memory_space<vmem>>, vector<1x32x1xf32>
    %37 = vector.shape_cast %36 : vector<1x32x1xf32> to vector<32x1xf32>
    %38 = vector.broadcast %37 : vector<32x1xf32> to vector<32x128xf32>
    %39 = arith.addf %34, %38 : vector<32x128xf32>
    %40 = math.tanh %39 : vector<32x128xf32>
    %c2_i32 = arith.constant 2 : i32
    %41 = vector.broadcast %3 : vector<32x1xf32> to vector<32x128xf32>
    %42 = arith.mulf %41, %40 : vector<32x128xf32>
    %cst_19 = arith.constant dense<0.000000e+00> : vector<128xf32>
    %43 = vector.multi_reduction <add>, %42, %cst_19 [0] : vector<32x128xf32> to vector<128xf32>
    %44 = vector.shape_cast %43 : vector<128xf32> to vector<1x128xf32>
    %45 = vector.broadcast %4 : f32 to vector<1x128xf32>
    %46 = arith.addf %44, %45 : vector<1x128xf32>
    %c0_20 = arith.constant 0 : index
    %47 = arith.index_cast %6 : i32 to index
    %48 = vector.load %arg8[%c0_20, %47] : memref<1x128xf32, #tpu.memory_space<vmem>>, vector<1x128xf32>
    tpu.vector_store %arg8[%c0_20, %47], %46 {strides = array<i32>} : memref<1x128xf32, #tpu.memory_space<vmem>>, vector<1x128xf32>,
    %c1_i32_21 = arith.constant 1 : i32
    return
  }
  func.func @transform_0(%arg0: i32) -> (i32, i32) {
    %c0_i32 = arith.constant 0 : i32
    %c0_i32_0 = arith.constant 0 : i32
    return %c0_i32, %arg0 : i32, i32
  }
  func.func @transform_1(%arg0: i32) -> (i32, i32) {
    %c0_i32 = arith.constant 0 : i32
    %c0_i32_0 = arith.constant 0 : i32
    %c0_i32_1 = arith.constant 0 : i32
    return %c0_i32, %c0_i32_0 : i32, i32
  }
  func.func @transform_2(%arg0: i32) -> (i32, i32) {
    %c0_i32 = arith.constant 0 : i32
    %c0_i32_0 = arith.constant 0 : i32
    %c0_i32_1 = arith.constant 0 : i32
    return %c0_i32, %c0_i32_0 : i32, i32
  }
  func.func @transform_3(%arg0: i32) -> (i32, i32, i32) {
    %c0_i32 = arith.constant 0 : i32
    %c0_i32_0 = arith.constant 0 : i32
    %c0_i32_1 = arith.constant 0 : i32
    %c0_i32_2 = arith.constant 0 : i32
    return %c0_i32, %c0_i32_0, %c0_i32_1 : i32, i32, i32
  }
  func.func @transform_4(%arg0: i32) -> (i32, i32, i32) {
    %c0_i32 = arith.constant 0 : i32
    %c0_i32_0 = arith.constant 0 : i32
    %c0_i32_1 = arith.constant 0 : i32
    %c0_i32_2 = arith.constant 0 : i32
    return %c0_i32, %c0_i32_0, %c0_i32_1 : i32, i32, i32
  }
  func.func @transform_5(%arg0: i32) -> (i32, i32) {
    %c0_i32 = arith.constant 0 : i32
    %c0_i32_0 = arith.constant 0 : i32
    %c0_i32_1 = arith.constant 0 : i32
    return %c0_i32, %c0_i32_0 : i32, i32
  }
  func.func @transform_6(%arg0: i32) -> i32 {
    %c0_i32 = arith.constant 0 : i32
    %c0_i32_0 = arith.constant 0 : i32
    return %c0_i32 : i32
  }
  func.func @transform_7(%arg0: i32) -> (i32, i32) {
    %c0_i32 = arith.constant 0 : i32
    %c0_i32_0 = arith.constant 0 : i32
    return %c0_i32, %arg0 : i32, i32
  }
}

</mosaic_0001>

<llo_original>
// kernel: net_forward.1
$region0: #{net_forward.1}
  #allocation0 [shape = 'u32[]', space=smem, size = 0x4, offset = 0x4, fixed_abs, tag = 'smem constant byte address 0x4 - core index']
  #allocation1 [shape = 'u32[72,128]{1,0:T(1,128)}', space=vmem, size = 0x9000, scoped, tag = 'internal scratch']
  #allocation2 [shape = 'f32[1]{0:T(128)S(6)}', space=smem, size = 0x200, scoped, tag = 'scoped memory for net_forward.1']
  %s0 = inlined_call_operand.vmem [shape: f32[2,128], index: 0, kind: input, shape index: {}]
  %s1 = inlined_call_operand.vmem [shape: f32[32,2], index: 1, kind: input, shape index: {}]
  %s2 = inlined_call_operand.vmem [shape: f32[32,1], index: 2, kind: input, shape index: {}]
  %s3 = inlined_call_operand.vmem [shape: f32[2,32,32], index: 3, kind: input, shape index: {}]
  %s4 = inlined_call_operand.vmem [shape: f32[2,32,1], index: 4, kind: input, shape index: {}]
  %s5 = inlined_call_operand.vmem [shape: f32[32,1], index: 5, kind: input, shape index: {}]
  %s6 = inlined_call_operand.<no memory space> [shape: f32[1], index: 6, kind: input, shape index: {}]
  %s7 = inlined_call_operand.vmem [shape: f32[1,128], index: 7, kind: output, shape index: {}]
  %s8 = sld [smem:[#allocation0]]
  $region38: #{net_forward.1} parent=0
    _
  %s10 = ssub.s32 1, %s8
  %s11 = scalar_select 0, %s10, %s8
  %12 = sst [smem:[#allocation2]] %s6
  // Predicated region
  $region2: #{net_forward.1} parent=0 // pred_check
    _
  $region3: #{net_forward.1} parent=0 // pred_check_branch
    %14 = sbr.rel (0) target = $region5
  $region4: #{net_forward.1} parent=0 // pred_region
    _
  $region5: #{net_forward.1} parent=0 // pred_fallthru
    _
  // Predicated region
  $region6: #{net_forward.1} parent=0 // pred_check
    _
  $region7: #{net_forward.1} parent=0 // pred_check_branch
    %16 = sbr.rel (0) target = $region9
  $region8: #{net_forward.1} parent=0 // pred_region
    _
  $region9: #{net_forward.1} parent=0 // pred_fallthru
    _
  // Predicated region
  $region10: #{net_forward.1} parent=0 // pred_check
    _
  $region11: #{net_forward.1} parent=0 // pred_check_branch
    %18 = sbr.rel (0) target = $region13
  $region12: #{net_forward.1} parent=0 // pred_region
    _
  $region13: #{net_forward.1} parent=0 // pred_fallthru
    _
  // Predicated region
  $region14: #{net_forward.1} parent=0 // pred_check
    _
  $region15: #{net_forward.1} parent=0 // pred_check_branch
    %20 = sbr.rel (0) target = $region17
  $region16: #{net_forward.1} parent=0 // pred_region
    _
  $region17: #{net_forward.1} parent=0 // pred_fallthru
    _
  // Predicated region
  $region18: #{net_forward.1} parent=0 // pred_check
    _
  $region19: #{net_forward.1} parent=0 // pred_check_branch
    %22 = sbr.rel (0) target = $region21
  $region20: #{net_forward.1} parent=0 // pred_region
    _
  $region21: #{net_forward.1} parent=0 // pred_fallthru
    _
  // Predicated region
  $region22: #{net_forward.1} parent=0 // pred_check
    _
  $region23: #{net_forward.1} parent=0 // pred_check_branch
    %24 = sbr.rel (0) target = $region25
  $region24: #{net_forward.1} parent=0 // pred_region
    _
  $region25: #{net_forward.1} parent=0 // pred_fallthru
    _
  // Predicated region
  $region26: #{net_forward.1} parent=0 // pred_check
    _
  $region27: #{net_forward.1} parent=0 // pred_check_branch
    %26 = sbr.rel (0) target = $region29
  $region28: #{net_forward.1} parent=0 // pred_region
    _
  $region29: #{net_forward.1} parent=0 // pred_fallthru
    _
  %v27 = vld [vmem:[%s1] sm:$0xff]
  %v28 = vld [vmem:[%s1 + $0x8] sm:$0xff]
  %v29 = vld [vmem:[%s1 + $0x10] sm:$0xff]
  %v30 = vld [vmem:[%s1 + $0x18] sm:$0xff]
  %v31 = vld [vmem:[%s2] sm:$0xff]
  %v32 = vld [vmem:[%s2 + $0x8] sm:$0xff]
  %v33 = vld [vmem:[%s2 + $0x10] sm:$0xff]
  %v34 = vld [vmem:[%s2 + $0x18] sm:$0xff]
  %v35 = vld [vmem:[%s5] sm:$0xff]
  %v36 = vld [vmem:[%s5 + $0x8] sm:$0xff]
  %v37 = vld [vmem:[%s5 + $0x10] sm:$0xff]
  %v38 = vld [vmem:[%s5 + $0x18] sm:$0xff]
  %s39 = sld [smem:[#allocation2]]
  %v40 = vld [vmem:[%s0] sm:$0x1]
  %v41 = vld [vmem:[%s0 + $0x1] sm:$0x1]
  %43 = vset.pattern.permute.xlu0 0
  %44 = vperm.xlu0 %43, %v27
  %v45 = vpop.permute.xlu0 %44
  %48 = vset.pattern.permute.xlu0 0
  %49 = vperm.xlu0 %48, %v28
  %v50 = vpop.permute.xlu0 %49
  %53 = vset.pattern.permute.xlu0 0
  %54 = vperm.xlu0 %53, %v29
  %v55 = vpop.permute.xlu0 %54
  %58 = vset.pattern.permute.xlu0 0
  %59 = vperm.xlu0 %58, %v30
  %v60 = vpop.permute.xlu0 %59
  %v62 = vperm.slane %v40, 0
  %v63 = vmul.f32 %v45, %v62
  %v64 = vmul.f32 %v50, %v62
  %v65 = vmul.f32 %v55, %v62
  %v66 = vmul.f32 %v60, %v62
  %67 = vset.pattern.permute.xlu0 1
  %68 = vperm.xlu0 %67, %v27
  %v69 = vpop.permute.xlu0 %68
  %71 = vset.pattern.permute.xlu0 1
  %72 = vperm.xlu0 %71, %v28
  %v73 = vpop.permute.xlu0 %72
  %75 = vset.pattern.permute.xlu0 1
  %76 = vperm.xlu0 %75, %v29
  %v77 = vpop.permute.xlu0 %76
  %79 = vset.pattern.permute.xlu0 1
  %80 = vperm.xlu0 %79, %v30
  %v81 = vpop.permute.xlu0 %80
  %v83 = vperm.slane %v41, 0
  %v84 = vmul.f32 %v69, %v83
  %v85 = vmul.f32 %v73, %v83
  %v86 = vmul.f32 %v77, %v83
  %v87 = vmul.f32 %v81, %v83
  %v88 = vadd.f32 %v63, %v84
  %v89 = vadd.f32 %v64, %v85
  %v90 = vadd.f32 %v65, %v86
  %v91 = vadd.f32 %v66, %v87
  %93 = vset.pattern.permute.xlu0 0
  %94 = vperm.xlu0 %93, %v31
  %v95 = vpop.permute.xlu0 %94
  %98 = vset.pattern.permute.xlu0 0
  %99 = vperm.xlu0 %98, %v32
  %v100 = vpop.permute.xlu0 %99
  %103 = vset.pattern.permute.xlu0 0
  %104 = vperm.xlu0 %103, %v33
  %v105 = vpop.permute.xlu0 %104
  %108 = vset.pattern.permute.xlu0 0
  %109 = vperm.xlu0 %108, %v34
  %v110 = vpop.permute.xlu0 %109
  %v112 = vadd.f32 %v88, %v95
  %v113 = vadd.f32 %v89, %v100
  %v114 = vadd.f32 %v90, %v105
  %v115 = vadd.f32 %v91, %v110
  %v116 = vtanh.pop %v112
  %v117 = vtanh.pop %v113
  %v118 = vtanh.pop %v114
  %v119 = vtanh.pop %v115
  %v120 = vld [vmem:[%s3] sm:$0xff]
  %v121 = vld [vmem:[%s3 + $0x8] sm:$0xff]
  %v122 = vld [vmem:[%s3 + $0x10] sm:$0xff]
  %v123 = vld [vmem:[%s3 + $0x18] sm:$0xff]
  %v124 = vld [vmem:[%s4] sm:$0xff]
  %v125 = vld [vmem:[%s4 + $0x8] sm:$0xff]
  %v126 = vld [vmem:[%s4 + $0x10] sm:$0xff]
  %v127 = vld [vmem:[%s4 + $0x18] sm:$0xff]
  %129 = vset.pattern.permute.xlu0 0
  %130 = vperm.xlu0 %129, %v124
  %v131 = vpop.permute.xlu0 %130
  %134 = vset.pattern.permute.xlu0 0
  %135 = vperm.xlu0 %134, %v125
  %v136 = vpop.permute.xlu0 %135
  %139 = vset.pattern.permute.xlu0 0
  %140 = vperm.xlu0 %139, %v126
  %v141 = vpop.permute.xlu0 %140
  %144 = vset.pattern.permute.xlu0 0
  %145 = vperm.xlu0 %144, %v127
  %v146 = vpop.permute.xlu0 %145
  %vm148 = vcmask 261120
  %v150 = vsel %vm148, %v120, 0
  %v153 = vsel %vm148, %v121, 0
  %v156 = vsel %vm148, %v122, 0
  %v159 = vsel %vm148, %v123, 0
  %161 = vmatpush.msra.mxu0 0.0
  %162 = vmatpush.msra.mxu0 0.0
  %163 = vmatpush.msra.mxu0 0.0
  %164 = vmatpush.msra.mxu0 0.0
  %165 = vmatpush.msra.mxu0 0.0
  %166 = vmatpush.msra.mxu0 0.0
  %167 = vmatpush.msra.mxu0 0.0
  %168 = vmatpush.msra.mxu0 0.0
  %169 = vmatpush.msra.mxu0 0.0
  %170 = vmatpush.msra.mxu0 0.0
  %171 = vmatpush.msra.mxu0 0.0
  %172 = vmatpush.msra.mxu0 0.0
  %173 = vmatpush.msra.mxu0 %v119
  %174 = vmatpush.msra.mxu0 %v118
  %175 = vmatpush.msra.mxu0 %v117
  %176 = vmatpush.msra.mxu0 %v116
  %177 = vmatmul.f32.gmra.mxu0 %v150
  %v178 = vpop.f32.mrf.mxu0
  %v179 = vadd.f32 %v131, %v178
  %180 = vmatmul.f32.gmra.mxu0 %v153
  %v181 = vpop.f32.mrf.mxu0
  %v182 = vadd.f32 %v136, %v181
  %183 = vmatmul.f32.gmra.mxu0 %v156
  %v184 = vpop.f32.mrf.mxu0
  %v185 = vadd.f32 %v141, %v184
  %186 = vmatmul.f32.gmra.mxu0 %v159
  %v187 = vpop.f32.mrf.mxu0
  %v188 = vadd.f32 %v146, %v187
  %189 = vdwg.mxu0
  %v190 = vtanh.pop %v179
  %v191 = vtanh.pop %v182
  %v192 = vtanh.pop %v185
  %v193 = vtanh.pop %v188
  %s194 = scalar_lea.vmem %s3, 32
  %v195 = vld [vmem:[%s194] sm:$0xff]
  %v196 = vld [vmem:[%s194 + $0x8] sm:$0xff]
  %v197 = vld [vmem:[%s194 + $0x10] sm:$0xff]
  %v198 = vld [vmem:[%s194 + $0x18] sm:$0xff]
  %s199 = scalar_lea.vmem %s4, 32
  %v200 = vld [vmem:[%s199] sm:$0xff]
  %v201 = vld [vmem:[%s199 + $0x8] sm:$0xff]
  %v202 = vld [vmem:[%s199 + $0x10] sm:$0xff]
  %v203 = vld [vmem:[%s199 + $0x18] sm:$0xff]
  %205 = vset.pattern.permute.xlu0 0
  %206 = vperm.xlu0 %205, %v200
  %v207 = vpop.permute.xlu0 %206
  %210 = vset.pattern.permute.xlu0 0
  %211 = vperm.xlu0 %210, %v201
  %v212 = vpop.permute.xlu0 %211
  %215 = vset.pattern.permute.xlu0 0
  %216 = vperm.xlu0 %215, %v202
  %v217 = vpop.permute.xlu0 %216
  %220 = vset.pattern.permute.xlu0 0
  %221 = vperm.xlu0 %220, %v203
  %v222 = vpop.permute.xlu0 %221
  %v225 = vsel %vm148, %v195, 0
  %v228 = vsel %vm148, %v196, 0
  %v231 = vsel %vm148, %v197, 0
  %v234 = vsel %vm148, %v198, 0
  %236 = vmatpush.msra.mxu0 0.0
  %237 = vmatpush.msra.mxu0 0.0
  %238 = vmatpush.msra.mxu0 0.0
  %239 = vmatpush.msra.mxu0 0.0
  %240 = vmatpush.msra.mxu0 0.0
  %241 = vmatpush.msra.mxu0 0.0
  %242 = vmatpush.msra.mxu0 0.0
  %243 = vmatpush.msra.mxu0 0.0
  %244 = vmatpush.msra.mxu0 0.0
  %245 = vmatpush.msra.mxu0 0.0
  %246 = vmatpush.msra.mxu0 0.0
  %247 = vmatpush.msra.mxu0 0.0
  %248 = vmatpush.msra.mxu0 %v193
  %249 = vmatpush.msra.mxu0 %v192
  %250 = vmatpush.msra.mxu0 %v191
  %251 = vmatpush.msra.mxu0 %v190
  %252 = vmatmul.f32.gmra.mxu0 %v225
  %v253 = vpop.f32.mrf.mxu0
  %v254 = vadd.f32 %v207, %v253
  %255 = vmatmul.f32.gmra.mxu0 %v228
  %v256 = vpop.f32.mrf.mxu0
  %v257 = vadd.f32 %v212, %v256
  %258 = vmatmul.f32.gmra.mxu0 %v231
  %v259 = vpop.f32.mrf.mxu0
  %v260 = vadd.f32 %v217, %v259
  %261 = vmatmul.f32.gmra.mxu0 %v234
  %v262 = vpop.f32.mrf.mxu0
  %v263 = vadd.f32 %v222, %v262
  %264 = vdwg.mxu0
  %v265 = vtanh.pop %v254
  %v266 = vtanh.pop %v257
  %v267 = vtanh.pop %v260
  %v268 = vtanh.pop %v263
  %270 = vset.pattern.permute.xlu0 0
  %271 = vperm.xlu0 %270, %v35
  %v272 = vpop.permute.xlu0 %271
  %275 = vset.pattern.permute.xlu0 0
  %276 = vperm.xlu0 %275, %v36
  %v277 = vpop.permute.xlu0 %276
  %280 = vset.pattern.permute.xlu0 0
  %281 = vperm.xlu0 %280, %v37
  %v282 = vpop.permute.xlu0 %281
  %285 = vset.pattern.permute.xlu0 0
  %286 = vperm.xlu0 %285, %v38
  %v287 = vpop.permute.xlu0 %286
  %v289 = vmul.f32 %v272, %v265
  %v290 = vmul.f32 %v277, %v266
  %v291 = vmul.f32 %v282, %v267
  %v292 = vmul.f32 %v287, %v268
  %v293 = vadd.f32 %v289, %v290
  %v294 = vadd.f32 %v293, %v291
  %v295 = vadd.f32 %v294, %v292
  %v296 = vrot.slane %v295, 4
  %v297 = vadd.f32 %v295, %v296
  %v298 = vrot.slane %v297, 2
  %v299 = vadd.f32 %v297, %v298
  %v300 = vrot.slane %v299, 1
  %v301 = vadd.f32 %v299, %v300
  %v302 = vstv %s39
  %v303 = vadd.f32 %v301, %v302
  %304 = vst [vmem:[%s7] sm:$0x1] %v303
  // Predicated region
  $region30: #{net_forward.1} parent=0 // pred_check
    _
  $region31: #{net_forward.1} parent=0 // pred_check_branch
    %306 = sbr.rel (0) target = $region33
  $region32: #{net_forward.1} parent=0 // pred_region
    _
  $region33: #{net_forward.1} parent=0 // pred_fallthru
    _
  // Predicated region
  $region34: #{net_forward.1} parent=0 // pred_check
    _
  $region35: #{net_forward.1} parent=0 // pred_check_branch
    %308 = sbr.rel (0) target = $region37
  $region36: #{net_forward.1} parent=0 // pred_region
    _
  $region37: #{net_forward.1} parent=0 // pred_fallthru
    _

</llo_original>
